<compile_context>
chip_gen: v7x
topology: tpu7x:2x2x1
jax: 0.10.0
libtpu: 0.0.40
codegen_flags: <defaults>
</compile_context>

<pallas_src>
import functools

import numpy as np
import jax
import jax.numpy as jnp
from jax.experimental import pallas as pl
from jax.experimental.pallas import tpu as pltpu

EPS = 1e-30          # only used for first_layer_act_ratio (as in the PyTorch code);
                     # the other EPS use in PyTorch is inside the STE *backward* only.
DELTA_TINY = 1e-30   # keeps log() finite when tanh(gamma*|x|) == 0
LANE = 128
SUBLANE = 8


def _round_up(n, m):
    return ((n + m - 1) // m) * m


# ----------------------------------------------------------------------------
# Fused Pallas kernel: grid = (batch_tiles, num_layers).
#   refs: x, w_masked[l], mask[l], w_cls[l]  ->  y ;  scratch: h (carried state)
# ----------------------------------------------------------------------------
def fused_harsanyi_kernel(x_ref, wm_ref, mk_ref, wc_ref, y_ref, h_ref, *, gamma):
    layer = pl.program_id(1)

    @pl.when(layer == 0)
    def _init():
        h_ref[...] = x_ref[...]                 # start of this batch tile
        y_ref[...] = jnp.zeros_like(y_ref)      # classifier accumulator

    h = h_ref[...]                              # (Bt, D)   f32
    wm = wm_ref[...]                            # (D, D)    W_fc * mask (padded)
    mk = mk_ref[...]                            # (D, D)    mask (padded)
    wc = wc_ref[...]                            # (C, D)    classifier head (padded)

    # Masked linear layer:  z = h @ (W_fc * mask)^T
    z = jax.lax.dot_general(h, wm, (((1,), (1,)), ((), ())),
                            preferred_element_type=jnp.float32)      # (Bt, D)

    # Trigger value ("AND" over selected children) as log-space matmul.
    t = jnp.log(jnp.tanh(gamma * jnp.abs(h)) + DELTA_TINY)           # (Bt, D)
    log_delta = jax.lax.dot_general(t, mk, (((1,), (1,)), ((), ())),
                                    preferred_element_type=jnp.float32)
    delta = jnp.exp(log_delta)                                       # (Bt, D)

    # Gate + ReLU; carry to next layer.
    h_new = jnp.maximum(z * delta, 0.0)
    h_ref[...] = h_new

    # Accumulate per-layer classifier output.
    y_ref[...] += jax.lax.dot_general(h_new, wc, (((1,), (1,)), ((), ())),
                                      preferred_element_type=jnp.float32)


# ----------------------------------------------------------------------------
# Parameter construction (mirrors the PyTorch __init__) and packing.
# ----------------------------------------------------------------------------
def xavier_uniform(key, out_dim, in_dim):
    bound = float(np.sqrt(6.0 / (in_dim + out_dim)))
    return jax.random.uniform(key, (out_dim, in_dim), jnp.float32, -bound, bound)


def make_v_weight(np_rng, out_dim, in_dim, act_ratio, initial_V):
    w = np.full((out_dim, in_dim), -initial_V, dtype=np.float32)
    n_act = int(act_ratio * in_dim)
    for i in range(out_dim):
        idx = np_rng.choice(in_dim, n_act, replace=False)
        w[i, idx] = initial_V
    return jnp.asarray(w)


def build_params(key, input_dim, hidden_dim, num_classes, num_layers,
                 act_ratio, initial_V):
    np_rng = np.random.RandomState(0)
    first_layer_act_ratio = max((1 + EPS) / input_dim, act_ratio)
    params = []
    for layer_index in range(num_layers):
        d_in = input_dim if layer_index == 0 else hidden_dim
        ratio = first_layer_act_ratio if layer_index == 0 else act_ratio
        key, k_fc, k_cls = jax.random.split(key, 3)
        w_fc = xavier_uniform(k_fc, hidden_dim, d_in)                 # HarsanyiBlock.fc
        v_w = make_v_weight(np_rng, hidden_dim, d_in, ratio, initial_V)  # .v
        w_cls = xavier_uniform(k_cls, num_classes, hidden_dim)        # net.fc[l]
        params.append((w_fc, v_w, w_cls))
    return params


def pack_params(params, input_dim, hidden_dim, num_classes):
    """Precompute mask / masked weights, zero-pad to lane multiples, stack by layer."""
    d_pad = _round_up(max(input_dim, hidden_dim), LANE)
    c_pad = _round_up(num_classes, LANE)
    wm_list, mk_list, wc_list = [], [], []
    for (w_fc, v_w, w_cls) in params:
        d_out, d_in = w_fc.shape
        mask = (v_w > 0).astype(jnp.float32)
        wm = w_fc * mask
        wm_list.append(jnp.zeros((d_pad, d_pad), jnp.float32).at[:d_out, :d_in].set(wm))
        mk_list.append(jnp.zeros((d_pad, d_pad), jnp.float32).at[:d_out, :d_in].set(mask))
        wc_list.append(jnp.zeros((c_pad, d_pad), jnp.float32)
                       .at[:num_classes, :d_out].set(w_cls))
    return {
        "w_masked": jnp.stack(wm_list),   # (L, D, D)
        "mask": jnp.stack(mk_list),       # (L, D, D)
        "w_cls": jnp.stack(wc_list),      # (L, C, D)
        "num_classes": num_classes,
    }


# ----------------------------------------------------------------------------
# Full HarsanyiNet forward: one pallas_call for all layers.
# ----------------------------------------------------------------------------
def harsanyi_net_forward(x, packed, gamma):
    wm_s, mk_s, wc_s = packed["w_masked"], packed["mask"], packed["w_cls"]
    n_cls = packed["num_classes"]
    if x.ndim > 2:
        x = jnp.squeeze(x, axis=1)
    B, d_in = x.shape
    L, d_pad, _ = wm_s.shape
    c_pad = wc_s.shape[1]

    b8 = _round_up(B, SUBLANE)
    b_tile = min(b8, 128)
    b_pad = _round_up(b8, b_tile)
    nb = b_pad // b_tile

    x_p = jnp.zeros((b_pad, d_pad), jnp.float32).at[:B, :d_in].set(
        x.astype(jnp.float32))

    # VMEM budget: double-buffered inputs + resident output + h scratch, with margin.
    est = 4 * (2 * b_tile * d_pad
               + 2 * (2 * d_pad * d_pad + c_pad * d_pad)
               + 2 * b_tile * c_pad
               + b_tile * d_pad)
    vmem_limit = int(min(max(2 * est, 16 * 2**20), 48 * 2**20))

    # NOTE: gamma is baked as a compile-time constant (changing it recompiles);
    # it could be passed as an SMEM scalar if runtime variation is needed.
    kernel = functools.partial(fused_harsanyi_kernel, gamma=float(gamma))

    y_pad = pl.pallas_call(
        kernel,
        out_shape=jax.ShapeDtypeStruct((b_pad, c_pad), jnp.float32),
        grid=(nb, L),
        in_specs=[
            pl.BlockSpec((b_tile, d_pad), lambda b, l: (b, 0)),
            pl.BlockSpec((None, d_pad, d_pad), lambda b, l: (l, 0, 0)),
            pl.BlockSpec((None, d_pad, d_pad), lambda b, l: (l, 0, 0)),
            pl.BlockSpec((None, c_pad, d_pad), lambda b, l: (l, 0, 0)),
        ],
        out_specs=pl.BlockSpec((b_tile, c_pad), lambda b, l: (b, 0)),
        scratch_shapes=[pltpu.VMEM((b_tile, d_pad), jnp.float32)],
        compiler_params=pltpu.CompilerParams(
            dimension_semantics=("parallel", "arbitrary"),
            vmem_limit_bytes=vmem_limit),
    )(x_p, wm_s, mk_s, wc_s)

    return y_pad[:B, :n_cls]


# Pure-JAX reference (direct product form, unpadded) for a correctness check.
def harsanyi_net_reference(x, params, gamma):
    if x.ndim > 2:
        x = jnp.squeeze(x, axis=1)
    hi = jax.lax.Precision.HIGHEST
    hidden_y = None
    h = x
    for (w_fc, v_w, w_cls) in params:
        mask = (v_w > 0).astype(jnp.float32)
        z = jnp.dot(h, (w_fc * mask).T, precision=hi)
        x_en = h[:, None, :] * mask[None, :, :]
        delta_en = (jnp.tanh(gamma * jnp.abs(x_en)) * mask[None, :, :]
                    + (1.0 - mask[None, :, :]))
        delta = jnp.prod(delta_en, axis=-1)
        h = jnp.maximum(z * delta, 0.0)
        y = jnp.dot(h, w_cls.T, precision=hi)
        hidden_y = y if hidden_y is None else hidden_y + y
    return hidden_y


if __name__ == "__main__":
    # Small, module-consistent shapes: flat MLP input (HarsanyiNet default input_dim=12).
    batch = 8
    input_dim = 12
    hidden_dim = 32
    num_classes = 2
    num_layers = 3
    gamma = 100.0
    initial_V = 1.0
    act_ratio = 0.1
    # TODO(synk): STE backward (custom sigmoid-like gradient) is training-only;
    # forward semantics ((v > 0) mask) are fully reproduced here.

    key = jax.random.PRNGKey(0)
    key, k_x, k_p = jax.random.split(key, 3)
    x = jax.random.normal(k_x, (batch, input_dim), dtype=jnp.float32)
    params = build_params(k_p, input_dim, hidden_dim, num_classes, num_layers,
                          act_ratio, initial_V)
    packed = pack_params(params, input_dim, hidden_dim, num_classes)

    out = harsanyi_net_forward(x, packed, gamma)
    out = jax.block_until_ready(out)

    ref = harsanyi_net_reference(x, params, gamma)
    ref = jax.block_until_ready(ref)

    assert out.shape == (batch, num_classes)
    np.testing.assert_allclose(np.asarray(out), np.asarray(ref),
                               rtol=2e-4, atol=1e-5)
    print("KERNEL_OK")
</pallas_src>

<mosaic_0001>
module attributes {stable_mosaic.version = 11 : i64} {
  func.func @fused_harsanyi_kernel(%arg0: i32, %arg1: i32, %arg2: memref<8x128xf32, #tpu.memory_space<vmem>>, %arg3: memref<1x128x128xf32, #tpu.memory_space<vmem>>, %arg4: memref<1x128x128xf32, #tpu.memory_space<vmem>>, %arg5: memref<1x128x128xf32, #tpu.memory_space<vmem>>, %arg6: memref<8x128xf32, #tpu.memory_space<vmem>>, %arg7: memref<8x128xf32, #tpu.memory_space<vmem>>) attributes {dimension_semantics = [#tpu.dimension_semantics<parallel>, #tpu.dimension_semantics<arbitrary>], iteration_bounds = array<i64: 1, 3>, scalar_prefetch = 0 : i64, scratch_operands = 1 : i64, tpu.core_type = #tpu.core_type<tc>, window_params = [{transform_indices = @transform_0, window_bounds = array<i64: 8, 128>}, {transform_indices = @transform_1, window_bounds = array<i64: 1, 128, 128>}, {transform_indices = @transform_2, window_bounds = array<i64: 1, 128, 128>}, {transform_indices = @transform_3, window_bounds = array<i64: 1, 128, 128>}, {transform_indices = @transform_4, window_bounds = array<i64: 8, 128>}]} {
    %c0_i32 = arith.constant 0 : i32
    %0 = arith.cmpi eq, %arg1, %c0_i32 : i32
    %1 = arith.extui %0 : i1 to i32
    %c0_i32_0 = arith.constant 0 : i32
    %2 = arith.cmpi ne, %1, %c0_i32_0 : i32
    scf.if %2 {
      %c0_22 = arith.constant 0 : index
      %c0_23 = arith.constant 0 : index
      %28 = vector.load %arg2[%c0_22, %c0_23] : memref<8x128xf32, #tpu.memory_space<vmem>>, vector<8x128xf32>
      %c0_24 = arith.constant 0 : index
      %c0_25 = arith.constant 0 : index
      %29 = vector.load %arg7[%c0_24, %c0_25] : memref<8x128xf32, #tpu.memory_space<vmem>>, vector<8x128xf32>
      tpu.vector_store %arg7[%c0_24, %c0_25], %28 {strides = array<i32>} : memref<8x128xf32, #tpu.memory_space<vmem>>, vector<8x128xf32>,
      %cst_26 = arith.constant 0.000000e+00 : f32
      %30 = vector.broadcast %cst_26 : f32 to vector<8x128xf32>
      %c0_27 = arith.constant 0 : index
      %c0_28 = arith.constant 0 : index
      %31 = vector.load %arg6[%c0_27, %c0_28] : memref<8x128xf32, #tpu.memory_space<vmem>>, vector<8x128xf32>
      tpu.vector_store %arg6[%c0_27, %c0_28], %30 {strides = array<i32>} : memref<8x128xf32, #tpu.memory_space<vmem>>, vector<8x128xf32>,
    } else {
    }
    %c0 = arith.constant 0 : index
    %c0_1 = arith.constant 0 : index
    %3 = vector.load %arg7[%c0, %c0_1] : memref<8x128xf32, #tpu.memory_space<vmem>>, vector<8x128xf32>
    %c0_2 = arith.constant 0 : index
    %c0_3 = arith.constant 0 : index
    %c0_4 = arith.constant 0 : index
    %4 = vector.load %arg3[%c0_2, %c0_3, %c0_4] : memref<1x128x128xf32, #tpu.memory_space<vmem>>, vector<1x128x128xf32>
    %5 = vector.shape_cast %4 : vector<1x128x128xf32> to vector<128x128xf32>
    %c0_5 = arith.constant 0 : index
    %c0_6 = arith.constant 0 : index
    %c0_7 = arith.constant 0 : index
    %6 = vector.load %arg4[%c0_5, %c0_6, %c0_7] : memref<1x128x128xf32, #tpu.memory_space<vmem>>, vector<1x128x128xf32>
    %7 = vector.shape_cast %6 : vector<1x128x128xf32> to vector<128x128xf32>
    %c0_8 = arith.constant 0 : index
    %c0_9 = arith.constant 0 : index
    %c0_10 = arith.constant 0 : index
    %8 = vector.load %arg5[%c0_8, %c0_9, %c0_10] : memref<1x128x128xf32, #tpu.memory_space<vmem>>, vector<1x128x128xf32>
    %9 = vector.shape_cast %8 : vector<1x128x128xf32> to vector<128x128xf32>
    %cst = arith.constant dense<0.000000e+00> : vector<8x128xf32>
    %10 = tpu.matmul %3, %5, %cst {dimension_numbers = #tpu.dot_dimension_numbers<[1], [1], [0], [0], [0, 0, 1, 0], [], []>} : vector<8x128xf32>, vector<128x128xf32>, vector<8x128xf32> -> vector<8x128xf32>
    %11 = math.absf %3 : vector<8x128xf32>
    %cst_11 = arith.constant 1.000000e+02 : f32
    %12 = vector.broadcast %cst_11 : f32 to vector<8x128xf32>
    %13 = arith.mulf %12, %11 : vector<8x128xf32>
    %14 = math.tanh %13 : vector<8x128xf32>
    %cst_12 = arith.constant 1.000000e-30 : f32
    %15 = vector.broadcast %cst_12 : f32 to vector<8x128xf32>
    %16 = arith.addf %14, %15 : vector<8x128xf32>
    %17 = math.log %16 : vector<8x128xf32>
    %cst_13 = arith.constant dense<0.000000e+00> : vector<8x128xf32>
    %18 = tpu.matmul %17, %7, %cst_13 {dimension_numbers = #tpu.dot_dimension_numbers<[1], [1], [0], [0], [0, 0, 1, 0], [], []>} : vector<8x128xf32>, vector<128x128xf32>, vector<8x128xf32> -> vector<8x128xf32>
    %19 = math.exp %18 : vector<8x128xf32>
    %20 = arith.mulf %10, %19 : vector<8x128xf32>
    %cst_14 = arith.constant 0.000000e+00 : f32
    %21 = vector.broadcast %cst_14 : f32 to vector<8x128xf32>
    %22 = arith.maximumf %20, %21 : vector<8x128xf32>
    %c0_15 = arith.constant 0 : index
    %c0_16 = arith.constant 0 : index
    %23 = vector.load %arg7[%c0_15, %c0_16] : memref<8x128xf32, #tpu.memory_space<vmem>>, vector<8x128xf32>
    tpu.vector_store %arg7[%c0_15, %c0_16], %22 {strides = array<i32>} : memref<8x128xf32, #tpu.memory_space<vmem>>, vector<8x128xf32>,
    %c0_17 = arith.constant 0 : index
    %c0_18 = arith.constant 0 : index
    %24 = vector.load %arg6[%c0_17, %c0_18] : memref<8x128xf32, #tpu.memory_space<vmem>>, vector<8x128xf32>
    %cst_19 = arith.constant dense<0.000000e+00> : vector<8x128xf32>
    %25 = tpu.matmul %22, %9, %cst_19 {dimension_numbers = #tpu.dot_dimension_numbers<[1], [1], [0], [0], [0, 0, 1, 0], [], []>} : vector<8x128xf32>, vector<128x128xf32>, vector<8x128xf32> -> vector<8x128xf32>
    %26 = arith.addf %24, %25 : vector<8x128xf32>
    %c0_20 = arith.constant 0 : index
    %c0_21 = arith.constant 0 : index
    %27 = vector.load %arg6[%c0_20, %c0_21] : memref<8x128xf32, #tpu.memory_space<vmem>>, vector<8x128xf32>
    tpu.vector_store %arg6[%c0_20, %c0_21], %26 {strides = array<i32>} : memref<8x128xf32, #tpu.memory_space<vmem>>, vector<8x128xf32>,
    return
  }
  func.func @transform_0(%arg0: i32, %arg1: i32) -> (i32, i32) {
    %c0_i32 = arith.constant 0 : i32
    %c0_i32_0 = arith.constant 0 : i32
    return %arg0, %c0_i32 : i32, i32
  }
  func.func @transform_1(%arg0: i32, %arg1: i32) -> (i32, i32, i32) {
    %c0_i32 = arith.constant 0 : i32
    %c0_i32_0 = arith.constant 0 : i32
    %c0_i32_1 = arith.constant 0 : i32
    return %arg1, %c0_i32, %c0_i32_0 : i32, i32, i32
  }
  func.func @transform_2(%arg0: i32, %arg1: i32) -> (i32, i32, i32) {
    %c0_i32 = arith.constant 0 : i32
    %c0_i32_0 = arith.constant 0 : i32
    %c0_i32_1 = arith.constant 0 : i32
    return %arg1, %c0_i32, %c0_i32_0 : i32, i32, i32
  }
  func.func @transform_3(%arg0: i32, %arg1: i32) -> (i32, i32, i32) {
    %c0_i32 = arith.constant 0 : i32
    %c0_i32_0 = arith.constant 0 : i32
    %c0_i32_1 = arith.constant 0 : i32
    return %arg1, %c0_i32, %c0_i32_0 : i32, i32, i32
  }
  func.func @transform_4(%arg0: i32, %arg1: i32) -> (i32, i32) {
    %c0_i32 = arith.constant 0 : i32
    %c0_i32_0 = arith.constant 0 : i32
    return %arg0, %c0_i32 : i32, i32
  }
}

</mosaic_0001>

<llo_original>
// kernel: tpu_custom_call.1
$region0: #{tpu_custom_call.1}
  #allocation0 [shape = 'u32[]', space=smem, size = 0x4, offset = 0x4, fixed_abs, tag = 'smem constant byte address 0x4 - core index']
  #allocation1 [shape = 'u32[144,128]{1,0:T(1,128)}', space=vmem, size = 0x12000, scoped, tag = 'internal scratch']
  #allocation2 [shape = 'f32[8,128]{1,0:T(8,128)}', space=vmem, size = 0x1000, scoped, tag = 'scratch operand']
  %s0 = inlined_call_operand.hbm [shape: f32[8,128], index: 0, kind: input, shape index: {}]
  %s1 = inlined_call_operand.hbm [shape: f32[3,128,128], index: 1, kind: input, shape index: {}]
  %s2 = inlined_call_operand.hbm [shape: f32[3,128,128], index: 2, kind: input, shape index: {}]
  %s3 = inlined_call_operand.hbm [shape: f32[3,128,128], index: 3, kind: input, shape index: {}]
  %s4 = inlined_call_operand.hbm [shape: f32[8,128], index: 4, kind: output, shape index: {}]
  %s5 = sld [smem:[#allocation0]]
  $region69: #{tpu_custom_call.1} parent=0
    _
  %s7 = ssub.s32 1, %s5
  %s8 = scalar_select 0, %s7, %s5
  $region1: #{tpu_custom_call.1} parent=0
    #allocation3 [shape = 'u8[4096]{0}', space=vmem, size = 0x1000, scoped, tag = 'input window, operand 0, single buffered']
    #allocation4 [shape = 's32[2]{0}', space=sflag, size = 0x8, scoped, tag = 'scoped memory for tpu_custom_call.1']
    #allocation5 [shape = 's32[2]{0}', space=sflag, size = 0x8, scoped, tag = 'scoped memory for tpu_custom_call.1']
    #allocation6 [shape = 'u8[131072]{0}', space=vmem, size = 0x20000, scoped, tag = 'input window, operand 1']
    #allocation7 [shape = 's32[2]{0}', space=sflag, size = 0x8, scoped, tag = 'scoped memory for tpu_custom_call.1']
    #allocation8 [shape = 'u8[131072]{0}', space=vmem, size = 0x20000, scoped, tag = 'input window, operand 2']
    #allocation9 [shape = 'u8[131072]{0}', space=vmem, size = 0x20000, scoped, tag = 'input window, operand 3']
    #allocation10 [shape = 's32[2]{0}', space=sflag, size = 0x8, scoped, tag = 'scoped memory for tpu_custom_call.1']
    #allocation11 [shape = 'u8[4096]{0}', space=vmem, size = 0x1000, scoped, tag = 'output window, operand 0, single buffered']
    %9 = vsyncpa [#allocation4], 0
    %10 = vsyncpa [#allocation7], 0
    %s11 = scalar_lea.sflag [#allocation7], 1
    %12 = vsyncpa %s11, 0
    %13 = vsyncpa [#allocation10], 0
    %s14 = scalar_lea.sflag [#allocation10], 1
    %15 = vsyncpa %s14, 0
    %16 = vsyncpa [#allocation5], 0
    loop: start=0, step=1, limit=5
    $region2: #{tpu_custom_call.1} parent=1 // loop_pre_header
      _
    $region3: #{tpu_custom_call.1} parent=1 // loop_header
      %s18 = sphi 0, %s22
      %p19 = scmp.ge.s32.totalorder %s18, 5
      %s25 = sphi 0, %s37
      %s26 = sphi 0, %s33
      %s27 = sphi 0, %s25
      %s28 = sphi 0, %s26
      %s29 = sphi 0, %s27
      %s30 = sphi 0, %s28
      %s40 = sphi 0, %s42
      %s43 = sphi 0, %s40
      %s44 = sphi 0, %s43
      %s60 = sphi 0, %s44
      %s66 = sphi 0, %s68
      %s69 = sphi 0, %s66
      %s70 = sphi 0, %s69
      %s86 = sphi 0, %s70
      %s92 = sphi 0, %s94
      %s95 = sphi 0, %s92
      %s96 = sphi 0, %s95
      %s112 = sphi 0, %s96
      %s118 = sphi 0, %s120
      %s121 = sphi 0, %s118
      %s122 = sphi 0, %s121
      %s138 = sphi 0, %s122
      %s144 = sphi 0, %s146
      %s147 = sphi 0, %s144
      %s148 = sphi 0, %s147
      %s164 = sphi 0, %s148
    $region4: #{tpu_custom_call.1} parent=1 // loop_header_branch
      %21 = sbr.rel (%p19) target = $region8
    $region5: #{tpu_custom_call.1} parent=1 // loop_body
      %s23 = ssub.s32 %s18, 1
      %s24 = ssub.s32 %s18, 2
      %s31 = sadd.s32 1, %s26
      %p32 = scmp.ge.s32.totalorder %s31, 3
      %s33 = scalar_select %p32, 0, %s31
      %s34 = sadd.s32 1, %s25
      %s35 = scalar_select %p32, %s34, %s25
      %p36 = scmp.ge.s32.totalorder %s35, 1
      %s37 = scalar_select %p36, 0, %s35
      %s38 = ssub.s32 %s25, %s37
      %p39 = scmp.eq.s32.totalorder %s38, 0
      %s41 = sadd.s32 %s40, 1
      %s42 = scalar_select %p39, %s40, %s41
      %p45 = pneg %p39
      %p46 = scmp.eq.s32.totalorder %s18, 2
      %p47 = por %p45, %p46
      %p48 = scmp.ne.s32.totalorder %s40, %s43
      %p49 = scmp.eq.s32.totalorder %s18, 0
      %p50 = por %p48, %p49
      %p51 = scmp.ne.s32.totalorder %s40, %s43
      %p52 = scmp.eq.s32.totalorder %s23, 2
      %p53 = por %p51, %p52
      %p54 = scmp.ne.s32.totalorder %s43, %s44
      %p55 = scmp.eq.s32.totalorder %s23, 0
      %p56 = por %p54, %p55
      %p57 = scmp.ne.s32.totalorder %s43, %s44
      %p58 = scmp.eq.s32.totalorder %s24, 2
      %p59 = por %p57, %p58
      %p61 = scmp.ne.s32.totalorder %s44, %s60
      %p62 = scmp.eq.s32.totalorder %s24, 0
      %p63 = por %p61, %p62
      %s64 = ssub.s32 %s26, %s33
      %p65 = scmp.eq.s32.totalorder %s64, 0
      %s67 = sadd.s32 %s66, 1
      %s68 = scalar_select %p65, %s66, %s67
      %p71 = pneg %p65
      %p72 = scmp.eq.s32.totalorder %s18, 2
      %p73 = por %p71, %p72
      %p74 = scmp.ne.s32.totalorder %s66, %s69
      %p75 = scmp.eq.s32.totalorder %s18, 0
      %p76 = por %p74, %p75
      %p77 = scmp.ne.s32.totalorder %s66, %s69
      %p78 = scmp.eq.s32.totalorder %s23, 2
      %p79 = por %p77, %p78
      %p80 = scmp.ne.s32.totalorder %s69, %s70
      %p81 = scmp.eq.s32.totalorder %s23, 0
      %p82 = por %p80, %p81
      %p83 = scmp.ne.s32.totalorder %s69, %s70
      %p84 = scmp.eq.s32.totalorder %s24, 2
      %p85 = por %p83, %p84
      %p87 = scmp.ne.s32.totalorder %s70, %s86
      %p88 = scmp.eq.s32.totalorder %s24, 0
      %p89 = por %p87, %p88
      %s90 = ssub.s32 %s26, %s33
      %p91 = scmp.eq.s32.totalorder %s90, 0
      %s93 = sadd.s32 %s92, 1
      %s94 = scalar_select %p91, %s92, %s93
      %p97 = pneg %p91
      %p98 = scmp.eq.s32.totalorder %s18, 2
      %p99 = por %p97, %p98
      %p100 = scmp.ne.s32.totalorder %s92, %s95
      %p101 = scmp.eq.s32.totalorder %s18, 0
      %p102 = por %p100, %p101
      %p103 = scmp.ne.s32.totalorder %s92, %s95
      %p104 = scmp.eq.s32.totalorder %s23, 2
      %p105 = por %p103, %p104
      %p106 = scmp.ne.s32.totalorder %s95, %s96
      %p107 = scmp.eq.s32.totalorder %s23, 0
      %p108 = por %p106, %p107
      %p109 = scmp.ne.s32.totalorder %s95, %s96
      %p110 = scmp.eq.s32.totalorder %s24, 2
      %p111 = por %p109, %p110
      %p113 = scmp.ne.s32.totalorder %s96, %s112
      %p114 = scmp.eq.s32.totalorder %s24, 0
      %p115 = por %p113, %p114
      %s116 = ssub.s32 %s26, %s33
      %p117 = scmp.eq.s32.totalorder %s116, 0
      %s119 = sadd.s32 %s118, 1
      %s120 = scalar_select %p117, %s118, %s119
      %p123 = pneg %p117
      %p124 = scmp.eq.s32.totalorder %s18, 2
      %p125 = por %p123, %p124
      %p126 = scmp.ne.s32.totalorder %s118, %s121
      %p127 = scmp.eq.s32.totalorder %s18, 0
      %p128 = por %p126, %p127
      %p129 = scmp.ne.s32.totalorder %s118, %s121
      %p130 = scmp.eq.s32.totalorder %s23, 2
      %p131 = por %p129, %p130
      %p132 = scmp.ne.s32.totalorder %s121, %s122
      %p133 = scmp.eq.s32.totalorder %s23, 0
      %p134 = por %p132, %p133
      %p135 = scmp.ne.s32.totalorder %s121, %s122
      %p136 = scmp.eq.s32.totalorder %s24, 2
      %p137 = por %p135, %p136
      %p139 = scmp.ne.s32.totalorder %s122, %s138
      %p140 = scmp.eq.s32.totalorder %s24, 0
      %p141 = por %p139, %p140
      %s142 = ssub.s32 %s25, %s37
      %p143 = scmp.eq.s32.totalorder %s142, 0
      %s145 = sadd.s32 %s144, 1
      %s146 = scalar_select %p143, %s144, %s145
      %p149 = pneg %p143
      %p150 = scmp.eq.s32.totalorder %s18, 2
      %p151 = por %p149, %p150
      %p152 = scmp.ne.s32.totalorder %s144, %s147
      %p153 = scmp.eq.s32.totalorder %s18, 0
      %p154 = por %p152, %p153
      %p155 = scmp.ne.s32.totalorder %s144, %s147
      %p156 = scmp.eq.s32.totalorder %s23, 2
      %p157 = por %p155, %p156
      %p158 = scmp.ne.s32.totalorder %s147, %s148
      %p159 = scmp.eq.s32.totalorder %s23, 0
      %p160 = por %p158, %p159
      %p161 = scmp.ne.s32.totalorder %s147, %s148
      %p162 = scmp.eq.s32.totalorder %s24, 2
      %p163 = por %p161, %p162
      %p165 = scmp.ne.s32.totalorder %s148, %s164
      %p166 = scmp.eq.s32.totalorder %s24, 0
      %p167 = por %p165, %p166
      %p168 = scmp.le.s32.totalorder 1, %s18
      %p169 = scmp.lt.s32.totalorder %s18, 4
      %p170 = pnand %p168, %p169
      %p171 = pneg %p170
      // Predicated region
      $region9: #{tpu_custom_call.1} parent=5 // pred_check
        _
      $region10: #{tpu_custom_call.1} parent=5 // pred_check_branch
        %173 = sbr.rel (%p170) target = $region12
      $region11: #{tpu_custom_call.1} parent=5 // pred_region
        %s174 = ssub.s32 %s18, 1
        // Predicated region
        $region13: #{tpu_custom_call.1} parent=11 // pred_check
          %p175 = pneg %p56
        $region14: #{tpu_custom_call.1} parent=11 // pred_check_branch
          %177 = sbr.rel (%p175) target = $region16
        $region15: #{tpu_custom_call.1} parent=11 // pred_region
          %s179 = ssub.s32 128, 128
          %180 = vsyncadd [#allocation4], %s179
          %s181 = smul.addr %s27, 128
          %s182 = scalar_lea.hbm %s0, %s181
          %s184 = sshll.u32 [#allocation3], 4
          %s185 = int_to_ptr.vmem [resolvable:$true] %s184
          %187 = dma.hbm_to_vmem [thread:$0]  %s182, 128, %s185, [#allocation4]
        $region16: #{tpu_custom_call.1} parent=11 // pred_fallthru
          _
      $region12: #{tpu_custom_call.1} parent=5 // pred_fallthru
        _
      %p188 = scmp.lt.s32.totalorder %s18, 3
      // Predicated region
      $region17: #{tpu_custom_call.1} parent=5 // pred_check
        %p189 = pneg %p188
      $region18: #{tpu_custom_call.1} parent=5 // pred_check_branch
        %191 = sbr.rel (%p189) target = $region20
      $region19: #{tpu_custom_call.1} parent=5 // pred_region
        // Predicated region
        $region21: #{tpu_custom_call.1} parent=19 // pred_check
          %p192 = pneg %p76
        $region22: #{tpu_custom_call.1} parent=19 // pred_check_branch
          %194 = sbr.rel (%p192) target = $region24
        $region23: #{tpu_custom_call.1} parent=19 // pred_region
          %s195 = sand.u32 %s18, 1
          %s196 = scalar_lea.sflag [#allocation7], %s195
          %s197 = sand.u32 %s66, 1
          %s198 = smul.addr %s197, 128
          %s199 = scalar_lea.vmem [#allocation6], %s198
          %s201 = ssub.s32 2048, 2048
          %202 = vsyncadd %s196, %s201
          %s203 = smul.addr %s26, 16
          %s204 = smul.addr %s203, 128
          %s205 = scalar_lea.hbm %s1, %s204
          %s206 = sshll.u32 %s199, 4
          %s207 = int_to_ptr.vmem [resolvable:$true] %s206
          %212 = dma.hbm_to_vmem [thread:$0]  %s205, 2048, %s207, %s196, 128, 128, 8
        $region24: #{tpu_custom_call.1} parent=19 // pred_fallthru
          _
        // Predicated region
        $region25: #{tpu_custom_call.1} parent=19 // pred_check
          %p213 = pneg %p102
        $region26: #{tpu_custom_call.1} parent=19 // pred_check_branch
          %215 = sbr.rel (%p213) target = $region28
        $region27: #{tpu_custom_call.1} parent=19 // pred_region
          %s216 = sand.u32 %s18, 1
          %s217 = scalar_lea.sflag [#allocation7], %s216
          %s218 = sand.u32 %s92, 1
          %s219 = smul.addr %s218, 128
          %s220 = scalar_lea.vmem [#allocation8], %s219
          %s222 = ssub.s32 2048, 2048
          %223 = vsyncadd %s217, %s222
          %s224 = smul.addr %s26, 16
          %s225 = smul.addr %s224, 128
          %s226 = scalar_lea.hbm %s2, %s225
          %s227 = sshll.u32 %s220, 4
          %s228 = int_to_ptr.vmem [resolvable:$true] %s227
          %233 = dma.hbm_to_vmem [thread:$0]  %s226, 2048, %s228, %s217, 128, 128, 8
        $region28: #{tpu_custom_call.1} parent=19 // pred_fallthru
          _
        // Predicated region
        $region29: #{tpu_custom_call.1} parent=19 // pred_check
          %p234 = pneg %p128
        $region30: #{tpu_custom_call.1} parent=19 // pred_check_branch
          %236 = sbr.rel (%p234) target = $region32
        $region31: #{tpu_custom_call.1} parent=19 // pred_region
          %s237 = sand.u32 %s118, 1
          %s238 = scalar_lea.sflag [#allocation10], %s237
          %s239 = sand.u32 %s118, 1
          %s240 = smul.addr %s239, 128
          %s241 = scalar_lea.vmem [#allocation9], %s240
          %s243 = ssub.s32 2048, 2048
          %244 = vsyncadd %s238, %s243
          %s245 = smul.addr %s26, 16
          %s246 = smul.addr %s245, 128
          %s247 = scalar_lea.hbm %s3, %s246
          %s248 = sshll.u32 %s241, 4
          %s249 = int_to_ptr.vmem [resolvable:$true] %s248
          %254 = dma.hbm_to_vmem [thread:$0]  %s247, 2048, %s249, %s238, 128, 128, 8
        $region32: #{tpu_custom_call.1} parent=19 // pred_fallthru
          _
      $region20: #{tpu_custom_call.1} parent=5 // pred_fallthru
        _
      %p255 = scmp.le.s32.totalorder 1, %s18
      %p256 = scmp.lt.s32.totalorder %s18, 4
      %p257 = pnand %p255, %p256
      %p258 = pneg %p257
      // Predicated region
      $region33: #{tpu_custom_call.1} parent=5 // pred_check
        _
      $region34: #{tpu_custom_call.1} parent=5 // pred_check_branch
        %260 = sbr.rel (%p257) target = $region36
      $region35: #{tpu_custom_call.1} parent=5 // pred_region
        %s261 = ssub.s32 %s18, 1
        // Predicated region
        $region37: #{tpu_custom_call.1} parent=35 // pred_check
          %p262 = pneg %p56
        $region38: #{tpu_custom_call.1} parent=35 // pred_check_branch
          %264 = sbr.rel (%p262) target = $region40
        $region39: #{tpu_custom_call.1} parent=35 // pred_region
          %265 = dma.done [#allocation4], 128
        $region40: #{tpu_custom_call.1} parent=35 // pred_fallthru
          _
        %s266 = sand.u32 %s23, 1
        %s267 = scalar_lea.sflag [#allocation7], %s266
        %s268 = sand.u32 %s69, 1
        %s269 = smul.addr %s268, 128
        %s270 = scalar_lea.vmem [#allocation6], %s269
        // Predicated region
        $region41: #{tpu_custom_call.1} parent=35 // pred_check
          %p271 = pneg %p82
        $region42: #{tpu_custom_call.1} parent=35 // pred_check_branch
          %273 = sbr.rel (%p271) target = $region44
        $region43: #{tpu_custom_call.1} parent=35 // pred_region
          %274 = dma.done %s267, 2048
        $region44: #{tpu_custom_call.1} parent=35 // pred_fallthru
          _
        %s275 = sand.u32 %s23, 1
        %s276 = scalar_lea.sflag [#allocation7], %s275
        %s277 = sand.u32 %s95, 1
        %s278 = smul.addr %s277, 128
        %s279 = scalar_lea.vmem [#allocation8], %s278
        // Predicated region
        $region45: #{tpu_custom_call.1} parent=35 // pred_check
          %p280 = pneg %p108
        $region46: #{tpu_custom_call.1} parent=35 // pred_check_branch
          %282 = sbr.rel (%p280) target = $region48
        $region47: #{tpu_custom_call.1} parent=35 // pred_region
          %283 = dma.done %s276, 2048
        $region48: #{tpu_custom_call.1} parent=35 // pred_fallthru
          _
        %s284 = sand.u32 %s121, 1
        %s285 = scalar_lea.sflag [#allocation10], %s284
        %s286 = sand.u32 %s121, 1
        %s287 = smul.addr %s286, 128
        %s288 = scalar_lea.vmem [#allocation9], %s287
        // Predicated region
        $region49: #{tpu_custom_call.1} parent=35 // pred_check
          %p289 = pneg %p134
        $region50: #{tpu_custom_call.1} parent=35 // pred_check_branch
          %291 = sbr.rel (%p289) target = $region52
        $region51: #{tpu_custom_call.1} parent=35 // pred_region
          %292 = dma.done %s285, 2048
        $region52: #{tpu_custom_call.1} parent=35 // pred_fallthru
          _
        %p293 = pneg %p56
        %p294 = pneg %p53
        %s295 = sand.u32 %s23, 1
        %s296 = scalar_lea.sflag [#allocation7], %s295
        %s297 = sand.u32 %s69, 1
        %s298 = smul.addr %s297, 128
        %s299 = scalar_lea.vmem [#allocation6], %s298
        %p300 = pneg %p82
        %p301 = pneg %p79
        %s302 = sand.u32 %s23, 1
        %s303 = scalar_lea.sflag [#allocation7], %s302
        %s304 = sand.u32 %s95, 1
        %s305 = smul.addr %s304, 128
        %s306 = scalar_lea.vmem [#allocation8], %s305
        %p307 = pneg %p108
        %p308 = pneg %p105
        %s309 = sand.u32 %s121, 1
        %s310 = scalar_lea.sflag [#allocation10], %s309
        %s311 = sand.u32 %s121, 1
        %s312 = smul.addr %s311, 128
        %s313 = scalar_lea.vmem [#allocation9], %s312
        %p314 = pneg %p134
        %p315 = pneg %p131
        %p316 = pneg %p160
        %p317 = pneg %p157
        %p318 = scmp.eq.s32.totalorder %s28, 0
        // Predicated region
        $region53: #{tpu_custom_call.1} parent=35 // pred_check
          %p319 = pneg %p318
        $region54: #{tpu_custom_call.1} parent=35 // pred_check_branch
          %321 = sbr.rel (%p319) target = $region56
        $region55: #{tpu_custom_call.1} parent=35 // pred_region
          %v322 = vld [vmem:[#allocation3] sm:$0xff]
          %323 = vst [vmem:[#allocation2] sm:$0xff] %v322
          %324 = vst [vmem:[#allocation11] sm:$0xff] 0.0
        $region56: #{tpu_custom_call.1} parent=35 // pred_fallthru
          _
        %v325 = vld [vmem:[#allocation2] sm:$0xff]
        %v326 = vld [vmem:[%s270] sm:$0xff]
        %v327 = vld [vmem:[%s270 + $0x8] sm:$0xff]
        %v328 = vld [vmem:[%s270 + $0x10] sm:$0xff]
        %v329 = vld [vmem:[%s270 + $0x18] sm:$0xff]
        %v330 = vld [vmem:[%s270 + $0x20] sm:$0xff]
        %v331 = vld [vmem:[%s270 + $0x28] sm:$0xff]
        %v332 = vld [vmem:[%s270 + $0x30] sm:$0xff]
        %v333 = vld [vmem:[%s270 + $0x38] sm:$0xff]
        %v334 = vld [vmem:[%s270 + $0x40] sm:$0xff]
        %v335 = vld [vmem:[%s270 + $0x48] sm:$0xff]
        %v336 = vld [vmem:[%s270 + $0x50] sm:$0xff]
        %v337 = vld [vmem:[%s270 + $0x58] sm:$0xff]
        %v338 = vld [vmem:[%s270 + $0x60] sm:$0xff]
        %v339 = vld [vmem:[%s270 + $0x68] sm:$0xff]
        %v340 = vld [vmem:[%s270 + $0x70] sm:$0xff]
        %v341 = vld [vmem:[%s270 + $0x78] sm:$0xff]
        %v342 = vld [vmem:[%s279] sm:$0xff]
        %v343 = vld [vmem:[%s279 + $0x8] sm:$0xff]
        %v344 = vld [vmem:[%s279 + $0x10] sm:$0xff]
        %v345 = vld [vmem:[%s279 + $0x18] sm:$0xff]
        %v346 = vld [vmem:[%s279 + $0x20] sm:$0xff]
        %v347 = vld [vmem:[%s279 + $0x28] sm:$0xff]
        %v348 = vld [vmem:[%s279 + $0x30] sm:$0xff]
        %v349 = vld [vmem:[%s279 + $0x38] sm:$0xff]
        %v350 = vld [vmem:[%s279 + $0x40] sm:$0xff]
        %v351 = vld [vmem:[%s279 + $0x48] sm:$0xff]
        %v352 = vld [vmem:[%s279 + $0x50] sm:$0xff]
        %v353 = vld [vmem:[%s279 + $0x58] sm:$0xff]
        %v354 = vld [vmem:[%s279 + $0x60] sm:$0xff]
        %v355 = vld [vmem:[%s279 + $0x68] sm:$0xff]
        %v356 = vld [vmem:[%s279 + $0x70] sm:$0xff]
        %v357 = vld [vmem:[%s279 + $0x78] sm:$0xff]
        %v358 = vld [vmem:[%s288] sm:$0xff]
        %v359 = vld [vmem:[%s288 + $0x8] sm:$0xff]
        %v360 = vld [vmem:[%s288 + $0x10] sm:$0xff]
        %v361 = vld [vmem:[%s288 + $0x18] sm:$0xff]
        %v362 = vld [vmem:[%s288 + $0x20] sm:$0xff]
        %v363 = vld [vmem:[%s288 + $0x28] sm:$0xff]
        %v364 = vld [vmem:[%s288 + $0x30] sm:$0xff]
        %v365 = vld [vmem:[%s288 + $0x38] sm:$0xff]
        %v366 = vld [vmem:[%s288 + $0x40] sm:$0xff]
        %v367 = vld [vmem:[%s288 + $0x48] sm:$0xff]
        %v368 = vld [vmem:[%s288 + $0x50] sm:$0xff]
        %v369 = vld [vmem:[%s288 + $0x58] sm:$0xff]
        %v370 = vld [vmem:[%s288 + $0x60] sm:$0xff]
        %v371 = vld [vmem:[%s288 + $0x68] sm:$0xff]
        %v372 = vld [vmem:[%s288 + $0x70] sm:$0xff]
        %v373 = vld [vmem:[%s288 + $0x78] sm:$0xff]
        %374 = vmatprep.subr.mxu0 0.0
        %375 = vmatpush1.xpose.msra.mxu0 %v326
        %376 = vmatprep.subr.mxu0 0.0
        %377 = vmatpush1.xpose.msra.mxu0 %v327
        %378 = vmatprep.subr.mxu0 0.0
        %379 = vmatpush1.xpose.msra.mxu0 %v328
        %380 = vmatprep.subr.mxu0 0.0
        %381 = vmatpush1.xpose.msra.mxu0 %v329
        %382 = vmatprep.subr.mxu0 0.0
        %383 = vmatpush1.xpose.msra.mxu0 %v330
        %384 = vmatprep.subr.mxu0 0.0
        %385 = vmatpush1.xpose.msra.mxu0 %v331
        %386 = vmatprep.subr.mxu0 0.0
        %387 = vmatpush1.xpose.msra.mxu0 %v332
        %388 = vmatprep.subr.mxu0 0.0
        %389 = vmatpush1.xpose.msra.mxu0 %v333
        %390 = vmatprep.subr.mxu0 0.0
        %391 = vmatpush1.xpose.msra.mxu0 %v334
        %392 = vmatprep.subr.mxu0 0.0
        %393 = vmatpush1.xpose.msra.mxu0 %v335
        %394 = vmatprep.subr.mxu0 0.0
        %395 = vmatpush1.xpose.msra.mxu0 %v336
        %396 = vmatprep.subr.mxu0 0.0
        %397 = vmatpush1.xpose.msra.mxu0 %v337
        %398 = vmatprep.subr.mxu0 0.0
        %399 = vmatpush1.xpose.msra.mxu0 %v338
        %400 = vmatprep.subr.mxu0 0.0
        %401 = vmatpush1.xpose.msra.mxu0 %v339
        %402 = vmatprep.subr.mxu0 0.0
        %403 = vmatpush1.xpose.msra.mxu0 %v340
        %404 = vmatprep.subr.mxu0 0.0
        %405 = vmatpush1.xpose.msra.mxu0 %v341
        %406 = vmatprep.subr.mxu0 0.0
        %407 = vmatpush1.xpose.msra.mxu0 0.0
        %408 = vmatprep.subr.mxu0 0.0
        %409 = vmatpush1.xpose.msra.mxu0 0.0
        %410 = vmatprep.subr.mxu0 0.0
        %411 = vmatpush1.xpose.msra.mxu0 0.0
        %412 = vmatprep.subr.mxu0 0.0
        %413 = vmatpush1.xpose.msra.mxu0 0.0
        %414 = vmatprep.subr.mxu0 0.0
        %415 = vmatpush1.xpose.msra.mxu0 0.0
        %416 = vmatprep.subr.mxu0 0.0
        %417 = vmatpush1.xpose.msra.mxu0 0.0
        %418 = vmatprep.subr.mxu0 0.0
        %419 = vmatpush1.xpose.msra.mxu0 0.0
        %420 = vmatprep.subr.mxu0 0.0
        %421 = vmatpush1.xpose.msra.mxu0 0.0
        %422 = vmatprep.subr.mxu0 0.0
        %423 = vmatpush1.xpose.msra.mxu0 0.0
        %424 = vmatprep.subr.mxu0 0.0
        %425 = vmatpush1.xpose.msra.mxu0 0.0
        %426 = vmatprep.subr.mxu0 0.0
        %427 = vmatpush1.xpose.msra.mxu0 0.0
        %428 = vmatprep.subr.mxu0 0.0
        %429 = vmatpush1.xpose.msra.mxu0 0.0
        %430 = vmatprep.subr.mxu0 0.0
        %431 = vmatpush1.xpose.msra.mxu0 0.0
        %432 = vmatprep.subr.mxu0 0.0
        %433 = vmatpush1.xpose.msra.mxu0 0.0
        %434 = vmatprep.subr.mxu0 0.0
        %435 = vmatpush1.xpose.msra.mxu0 0.0
        %436 = vmatprep.subr.mxu0 0.0
        %437 = vmatpush1.xpose.msra.mxu0 0.0
        %438 = vmatprep.mubr.f32.mxu0 0.0
        %439 = vmatmul.mubr.f32.gmra.mrb[0].mxu0 %v325
        %v440 = vpop.f32.mrb[0].mxu0
        %v441 = vadd.f32 0.0, %v440
        %v442 = vpop.f32.mrb[0].mxu0
        %443 = vdwg.mxu0
        %v444 = vand.u32 2147483647, %v325
        %v445 = vmul.f32 %v444, 100.0
        %v446 = vtanh.pop %v445
        %v447 = vadd.f32 %v446, 1e-30
        %v448 = vlog2.pop %v447
        %v449 = vmul.f32 %v448, 0.6931472
        %450 = vmatprep.subr.mxu0 0.0
        %451 = vmatpush1.xpose.msra.mxu0 %v342
        %452 = vmatprep.subr.mxu0 0.0
        %453 = vmatpush1.xpose.msra.mxu0 %v343
        %454 = vmatprep.subr.mxu0 0.0
        %455 = vmatpush1.xpose.msra.mxu0 %v344
        %456 = vmatprep.subr.mxu0 0.0
        %457 = vmatpush1.xpose.msra.mxu0 %v345
        %458 = vmatprep.subr.mxu0 0.0
        %459 = vmatpush1.xpose.msra.mxu0 %v346
        %460 = vmatprep.subr.mxu0 0.0
        %461 = vmatpush1.xpose.msra.mxu0 %v347
        %462 = vmatprep.subr.mxu0 0.0
        %463 = vmatpush1.xpose.msra.mxu0 %v348
        %464 = vmatprep.subr.mxu0 0.0
        %465 = vmatpush1.xpose.msra.mxu0 %v349
        %466 = vmatprep.subr.mxu0 0.0
        %467 = vmatpush1.xpose.msra.mxu0 %v350
        %468 = vmatprep.subr.mxu0 0.0
        %469 = vmatpush1.xpose.msra.mxu0 %v351
        %470 = vmatprep.subr.mxu0 0.0
        %471 = vmatpush1.xpose.msra.mxu0 %v352
        %472 = vmatprep.subr.mxu0 0.0
        %473 = vmatpush1.xpose.msra.mxu0 %v353
        %474 = vmatprep.subr.mxu0 0.0
        %475 = vmatpush1.xpose.msra.mxu0 %v354
        %476 = vmatprep.subr.mxu0 0.0
        %477 = vmatpush1.xpose.msra.mxu0 %v355
        %478 = vmatprep.subr.mxu0 0.0
        %479 = vmatpush1.xpose.msra.mxu0 %v356
        %480 = vmatprep.subr.mxu0 0.0
        %481 = vmatpush1.xpose.msra.mxu0 %v357
        %482 = vmatprep.subr.mxu0 0.0
        %483 = vmatpush1.xpose.msra.mxu0 0.0
        %484 = vmatprep.subr.mxu0 0.0
        %485 = vmatpush1.xpose.msra.mxu0 0.0
        %486 = vmatprep.subr.mxu0 0.0
        %487 = vmatpush1.xpose.msra.mxu0 0.0
        %488 = vmatprep.subr.mxu0 0.0
        %489 = vmatpush1.xpose.msra.mxu0 0.0
        %490 = vmatprep.subr.mxu0 0.0
        %491 = vmatpush1.xpose.msra.mxu0 0.0
        %492 = vmatprep.subr.mxu0 0.0
        %493 = vmatpush1.xpose.msra.mxu0 0.0
        %494 = vmatprep.subr.mxu0 0.0
        %495 = vmatpush1.xpose.msra.mxu0 0.0
        %496 = vmatprep.subr.mxu0 0.0
        %497 = vmatpush1.xpose.msra.mxu0 0.0
        %498 = vmatprep.subr.mxu0 0.0
        %499 = vmatpush1.xpose.msra.mxu0 0.0
        %500 = vmatprep.subr.mxu0 0.0
        %501 = vmatpush1.xpose.msra.mxu0 0.0
        %502 = vmatprep.subr.mxu0 0.0
        %503 = vmatpush1.xpose.msra.mxu0 0.0
        %504 = vmatprep.subr.mxu0 0.0
        %505 = vmatpush1.xpose.msra.mxu0 0.0
        %506 = vmatprep.subr.mxu0 0.0
        %507 = vmatpush1.xpose.msra.mxu0 0.0
        %508 = vmatprep.subr.mxu0 0.0
        %509 = vmatpush1.xpose.msra.mxu0 0.0
        %510 = vmatprep.subr.mxu0 0.0
        %511 = vmatpush1.xpose.msra.mxu0 0.0
        %512 = vmatprep.subr.mxu0 0.0
        %513 = vmatpush1.xpose.msra.mxu0 0.0
        %514 = vmatprep.mubr.f32.mxu0 0.0
        %515 = vmatmul.mubr.f32.gmra.mrb[0].mxu0 %v449
        %v516 = vpop.f32.mrb[0].mxu0
        %v517 = vadd.f32 0.0, %v516
        %v518 = vpop.f32.mrb[0].mxu0
        %519 = vdwg.mxu0
        %v520 = vmul.f32 %v517, 1.442695
        %v521 = vpow.pop %v520
        %v522 = vmul.f32 %v441, %v521
        %v523 = vmax.f32 %v522, 0.0
        %524 = vst [vmem:[#allocation2] sm:$0xff] %v523
        %v525 = vld [vmem:[#allocation11] sm:$0xff]
        %526 = vmatprep.subr.mxu0 0.0
        %527 = vmatpush1.xpose.msra.mxu0 %v358
        %528 = vmatprep.subr.mxu0 0.0
        %529 = vmatpush1.xpose.msra.mxu0 %v359
        %530 = vmatprep.subr.mxu0 0.0
        %531 = vmatpush1.xpose.msra.mxu0 %v360
        %532 = vmatprep.subr.mxu0 0.0
        %533 = vmatpush1.xpose.msra.mxu0 %v361
        %534 = vmatprep.subr.mxu0 0.0
        %535 = vmatpush1.xpose.msra.mxu0 %v362
        %536 = vmatprep.subr.mxu0 0.0
        %537 = vmatpush1.xpose.msra.mxu0 %v363
        %538 = vmatprep.subr.mxu0 0.0
        %539 = vmatpush1.xpose.msra.mxu0 %v364
        %540 = vmatprep.subr.mxu0 0.0
        %541 = vmatpush1.xpose.msra.mxu0 %v365
        %542 = vmatprep.subr.mxu0 0.0
        %543 = vmatpush1.xpose.msra.mxu0 %v366
        %544 = vmatprep.subr.mxu0 0.0
        %545 = vmatpush1.xpose.msra.mxu0 %v367
        %546 = vmatprep.subr.mxu0 0.0
        %547 = vmatpush1.xpose.msra.mxu0 %v368
        %548 = vmatprep.subr.mxu0 0.0
        %549 = vmatpush1.xpose.msra.mxu0 %v369
        %550 = vmatprep.subr.mxu0 0.0
        %551 = vmatpush1.xpose.msra.mxu0 %v370
        %552 = vmatprep.subr.mxu0 0.0
        %553 = vmatpush1.xpose.msra.mxu0 %v371
        %554 = vmatprep.subr.mxu0 0.0
        %555 = vmatpush1.xpose.msra.mxu0 %v372
        %556 = vmatprep.subr.mxu0 0.0
        %557 = vmatpush1.xpose.msra.mxu0 %v373
        %558 = vmatprep.subr.mxu0 0.0
        %559 = vmatpush1.xpose.msra.mxu0 0.0
        %560 = vmatprep.subr.mxu0 0.0
        %561 = vmatpush1.xpose.msra.mxu0 0.0
        %562 = vmatprep.subr.mxu0 0.0
        %563 = vmatpush1.xpose.msra.mxu0 0.0
        %564 = vmatprep.subr.mxu0 0.0
        %565 = vmatpush1.xpose.msra.mxu0 0.0
        %566 = vmatprep.subr.mxu0 0.0
        %567 = vmatpush1.xpose.msra.mxu0 0.0
        %568 = vmatprep.subr.mxu0 0.0
        %569 = vmatpush1.xpose.msra.mxu0 0.0
        %570 = vmatprep.subr.mxu0 0.0
        %571 = vmatpush1.xpose.msra.mxu0 0.0
        %572 = vmatprep.subr.mxu0 0.0
        %573 = vmatpush1.xpose.msra.mxu0 0.0
        %574 = vmatprep.subr.mxu0 0.0
        %575 = vmatpush1.xpose.msra.mxu0 0.0
        %576 = vmatprep.subr.mxu0 0.0
        %577 = vmatpush1.xpose.msra.mxu0 0.0
        %578 = vmatprep.subr.mxu0 0.0
        %579 = vmatpush1.xpose.msra.mxu0 0.0
        %580 = vmatprep.subr.mxu0 0.0
        %581 = vmatpush1.xpose.msra.mxu0 0.0
        %582 = vmatprep.subr.mxu0 0.0
        %583 = vmatpush1.xpose.msra.mxu0 0.0
        %584 = vmatprep.subr.mxu0 0.0
        %585 = vmatpush1.xpose.msra.mxu0 0.0
        %586 = vmatprep.subr.mxu0 0.0
        %587 = vmatpush1.xpose.msra.mxu0 0.0
        %588 = vmatprep.subr.mxu0 0.0
        %589 = vmatpush1.xpose.msra.mxu0 0.0
        %590 = vmatprep.mubr.f32.mxu0 0.0
        %591 = vmatmul.mubr.f32.gmra.mrb[0].mxu0 %v523
        %v592 = vpop.f32.mrb[0].mxu0
        %v593 = vadd.f32 0.0, %v592
        %v594 = vpop.f32.mrb[0].mxu0
        %595 = vdwg.mxu0
        %v596 = vadd.f32 %v525, %v593
        %597 = vst [vmem:[#allocation11] sm:$0xff] %v596
        // Predicated region
        $region57: #{tpu_custom_call.1} parent=35 // pred_check
          %p598 = pneg %p157
        $region58: #{tpu_custom_call.1} parent=35 // pred_check_branch
          %600 = sbr.rel (%p598) target = $region60
        $region59: #{tpu_custom_call.1} parent=35 // pred_region
          %s602 = ssub.s32 128, 128
          %603 = vsyncadd [#allocation5], %s602
          %s604 = smul.addr %s27, 128
          %s605 = scalar_lea.hbm %s4, %s604
          %s607 = sshll.u32 [#allocation11], 4
          %s608 = int_to_ptr.vmem [resolvable:$true] %s607
          %610 = dma.vmem_to_hbm [thread:$0]  %s608, 128, %s605, [#allocation5]
        $region60: #{tpu_custom_call.1} parent=35 // pred_fallthru
          _
        // Predicated region
        $region61: #{tpu_custom_call.1} parent=35 // pred_check
          %p611 = pneg %p157
        $region62: #{tpu_custom_call.1} parent=35 // pred_check_branch
          %613 = sbr.rel (%p611) target = $region64
        $region63: #{tpu_custom_call.1} parent=35 // pred_region
          %614 = dma.done [#allocation5], 128
        $region64: #{tpu_custom_call.1} parent=35 // pred_fallthru
          _
      $region36: #{tpu_custom_call.1} parent=5 // pred_fallthru
        _
      %p615 = scmp.le.s32.totalorder 2, %s18
      // Predicated region
      $region65: #{tpu_custom_call.1} parent=5 // pred_check
        %p616 = pneg %p615
      $region66: #{tpu_custom_call.1} parent=5 // pred_check_branch
        %618 = sbr.rel (%p616) target = $region68
      $region67: #{tpu_custom_call.1} parent=5 // pred_region
        %s619 = ssub.s32 %s18, 2
      $region68: #{tpu_custom_call.1} parent=5 // pred_fallthru
        _
    $region6: #{tpu_custom_call.1} parent=1 // loop_footer
      %s22 = sadd.s32 1, %s18
    $region7: #{tpu_custom_call.1} parent=1 // loop_footer_branch
      %17 = sbr.rel target = $region3
    $region8: #{tpu_custom_call.1} parent=1 // loop_exit
      _
    %620 = vsyncpa [#allocation4], 1
    %s621 = scalar_lea.sflag [#allocation4], 1
    %622 = vsyncpa %s621, 1
    %623 = vsyncpa [#allocation7], 1
    %s624 = scalar_lea.sflag [#allocation7], 1
    %625 = vsyncpa %s624, 1
    %626 = vsyncpa [#allocation10], 1
    %s627 = scalar_lea.sflag [#allocation10], 1
    %628 = vsyncpa %s627, 1
    %629 = vsyncpa [#allocation5], 1
    %s630 = scalar_lea.sflag [#allocation5], 1
    %631 = vsyncpa %s630, 1

</llo_original>
